<compile_context>
chip_gen: v5e
topology: v5e:2x2
jax: 0.10.0
libtpu: 0.0.40
codegen_flags: <defaults>
</compile_context>

<pallas_src>
import functools

import jax
import jax.numpy as jnp
from jax import lax
from jax.experimental import pallas as pl
from jax.experimental.pallas import tpu as pltpu

_LANES = 512                           # fallback lane-dense last dim (mult of 128)
_TILE_BYTES = 4 * 1024 * 1024          # ~4 MiB streamed tiles (amortize step overhead)
_CHUNK_BYTES = 512 * 1024              # fast-path in-VMEM reduction chunk size
_FAST_PATH_BYTES = 10 * 1024 * 1024    # whole-array-resident below this
_VMEM_LIMIT_STREAM = 32 * 1024 * 1024  # safe on v5e/v6e (128 MiB) and v7x (64 MiB)
_VMEM_LIMIT_FAST = 48 * 1024 * 1024    # fast path: in + out resident, capped for v7x
_NUM_SPLITS = 2                        # shard the pass-1 reduction across v7x's 2 TCs


def _whole_array_kernel(x_ref, o_ref, *, inv_n, chunk_rows):
    # Global mean over the (possibly zero-padded) slab.  Zeros don't perturb
    # the sum and inv_n uses the true element count, so the mean is exact.
    # The sum is chunked so sub-32-bit inputs never need a full f32 VMEM copy.
    rows, lanes = x_ref.shape
    n_full = rows // chunk_rows
    rem = rows - n_full * chunk_rows

    def body(c, acc):
        blk = x_ref[pl.ds(c * chunk_rows, chunk_rows), :]
        return acc + jnp.sum(blk.astype(jnp.float32), axis=0, keepdims=True)

    acc = jnp.zeros((1, lanes), jnp.float32)
    if n_full > 0:      # static
        acc = lax.fori_loop(0, n_full, body, acc)
    if rem > 0:         # static remainder
        blk = x_ref[pl.ds(n_full * chunk_rows, rem), :]
        acc = acc + jnp.sum(blk.astype(jnp.float32), axis=0, keepdims=True)

    mean = (jnp.sum(acc) * jnp.float32(inv_n)).astype(o_ref.dtype)
    o_ref[...] = x_ref[...] - mean


def _partial_sum_kernel(x_ref, psum_ref, *, tile_rows, tiles_per_split,
                        total_rows, needs_mask):
    # Per-split accumulator-resident (1, 1, lanes) f32 output block: same
    # block index for every step of the "arbitrary" (reduction) grid axis.
    i = pl.program_id(1)

    @pl.when(i == 0)
    def _():
        psum_ref[...] = jnp.zeros_like(psum_ref)

    xv = x_ref[...].astype(jnp.float32)
    if needs_mask:
        # Mask rows past the end of the slab: covers both the ragged last
        # tile (OOB reads are garbage) and duplicated clamped boundary tiles.
        tile_id = pl.program_id(0) * tiles_per_split + i
        row_ids = tile_id * tile_rows + lax.broadcasted_iota(
            jnp.int32, (tile_rows, 1), 0)
        xv = jnp.where(row_ids < total_rows, xv, 0.0)

    psum_ref[...] += jnp.sum(xv, axis=0, keepdims=True).reshape(psum_ref.shape)


def _subtract_kernel(mean_ref, x_ref, o_ref):
    # mean_ref: (1,) f32 in SMEM; subtract in the input dtype (no f32 tile copy).
    mean = mean_ref[0].astype(x_ref.dtype)
    o_ref[...] = x_ref[...] - mean


def centered_layer(x: jax.Array, *, force_tiled: bool = False) -> jax.Array:
    """x - x.mean() (mean over all elements), matching torch CenteredLayer."""
    orig_shape = x.shape
    n = x.size
    if n == 0:
        return x
    inv_n = 1.0 / float(n)
    itemsize = jnp.dtype(x.dtype).itemsize

    # ---- choose a lane-dense 2-D view, avoiding relayout / pad when possible
    if x.ndim >= 2 and x.shape[-1] % 128 == 0 and 128 <= x.shape[-1] <= 2048:
        lanes = x.shape[-1]
        padded = False
        x2d = x.reshape(-1, lanes)            # collapse leading dims: free
    elif n % _LANES == 0:
        lanes = _LANES
        padded = False
        x2d = x.reshape(-1, lanes)
    else:
        lanes = _LANES
        padded = True
        rows_p = pl.cdiv(n, lanes)
        flat = jnp.pad(x.reshape(-1), (0, rows_p * lanes - n))
        x2d = flat.reshape(rows_p, lanes)

    rows = x2d.shape[0]
    bytes_2d = rows * lanes * itemsize

    if (not force_tiled) and bytes_2d <= _FAST_PATH_BYTES:
        # ---- fast path: whole slab resident in VMEM (single DMA in / out) --
        chunk_rows = max(8, (_CHUNK_BYTES // (lanes * itemsize)) // 8 * 8)
        chunk_rows = min(chunk_rows, rows)
        out2d = pl.pallas_call(
            functools.partial(_whole_array_kernel, inv_n=inv_n,
                              chunk_rows=chunk_rows),
            out_shape=jax.ShapeDtypeStruct(x2d.shape, x.dtype),
            in_specs=[pl.BlockSpec(x2d.shape, lambda: (0, 0))],
            out_specs=pl.BlockSpec(x2d.shape, lambda: (0, 0)),
            compiler_params=pltpu.CompilerParams(
                vmem_limit_bytes=_VMEM_LIMIT_FAST),
            cost_estimate=pl.CostEstimate(
                flops=2 * n, transcendentals=0, bytes_accessed=2 * bytes_2d),
        )(x2d)
    else:
        # ---- pass 1: streamed partial sums, sharded across TensorCores -----
        target_rows = max(8, (_TILE_BYTES // (lanes * itemsize)) // 8 * 8)
        tile_rows = min(target_rows, rows)
        num_tiles = pl.cdiv(rows, tile_rows)
        num_splits = min(_NUM_SPLITS, num_tiles)
        tiles_per_split = pl.cdiv(num_tiles, num_splits)
        needs_mask = (num_splits * tiles_per_split * tile_rows != rows)

        def in_map1(c, i):
            # Clamp so boundary tiles stay in bounds; the kernel masks the
            # duplicated / ragged rows so they contribute zero to the sum.
            return (jnp.minimum(c * tiles_per_split + i, num_tiles - 1), 0)

        psum = pl.pallas_call(
            functools.partial(_partial_sum_kernel, tile_rows=tile_rows,
                              tiles_per_split=tiles_per_split,
                              total_rows=rows, needs_mask=needs_mask),
            out_shape=jax.ShapeDtypeStruct((num_splits, 1, lanes), jnp.float32),
            grid=(num_splits, tiles_per_split),
            in_specs=[pl.BlockSpec((tile_rows, lanes), in_map1)],
            out_specs=pl.BlockSpec((1, 1, lanes), lambda c, i: (c, 0, 0)),
            compiler_params=pltpu.CompilerParams(
                dimension_semantics=("parallel", "arbitrary"),
                vmem_limit_bytes=_VMEM_LIMIT_STREAM),
            cost_estimate=pl.CostEstimate(
                flops=n, transcendentals=0, bytes_accessed=bytes_2d),
        )(x2d)

        # TODO(synk): fold this tiny (num_splits, lanes) -> scalar reduction and
        # the *inv_n scale into pass 1's final grid step to shave the launch gap.
        mean = (jnp.sum(psum) * jnp.float32(inv_n)).reshape(1)

        # x2d is a dead private copy only when we padded; alias it then so the
        # large path doesn't allocate a second full-size HBM buffer.
        aliases = {1: 0} if padded else {}

        # ---- pass 2: streamed elementwise subtract (tiles independent) -----
        out2d = pl.pallas_call(
            _subtract_kernel,
            out_shape=jax.ShapeDtypeStruct(x2d.shape, x.dtype),
            grid=(num_tiles,),
            in_specs=[
                pl.BlockSpec(memory_space=pltpu.MemorySpace.SMEM),
                pl.BlockSpec((tile_rows, lanes), lambda i: (i, 0)),
            ],
            out_specs=pl.BlockSpec((tile_rows, lanes), lambda i: (i, 0)),
            input_output_aliases=aliases,
            compiler_params=pltpu.CompilerParams(
                dimension_semantics=("parallel",),
                vmem_limit_bytes=_VMEM_LIMIT_STREAM),
            cost_estimate=pl.CostEstimate(
                flops=n, transcendentals=0, bytes_accessed=2 * bytes_2d),
        )(mean, x2d)

    if padded:
        return out2d.reshape(-1)[:n].reshape(orig_shape)
    return out2d.reshape(orig_shape)


if __name__ == "__main__":
    key = jax.random.PRNGKey(0)
    k1, k2 = jax.random.split(key)

    # Small dense input consistent with the module's forward (any tensor works).
    x = jax.random.normal(k1, (2, 4, 16, 16), dtype=jnp.float32)

    # Fast (whole-array-resident) path.
    y_fast = centered_layer(x)
    jax.block_until_ready(y_fast)

    # Tiled two-pass path, forced, so both kernel variants run on TPU.
    y_tiled = centered_layer(x, force_tiled=True)
    jax.block_until_ready(y_tiled)

    y_ref = x - jnp.mean(x)
    assert y_fast.shape == x.shape and y_tiled.shape == x.shape
    assert jnp.allclose(y_fast, y_ref, atol=1e-6), "fast path mismatch"
    assert jnp.allclose(y_tiled, y_ref, atol=1e-6), "tiled path mismatch"
    # Centered output has ~zero mean, like the torch module.
    assert abs(float(jnp.mean(y_fast))) < 1e-5
    assert abs(float(jnp.mean(y_tiled))) < 1e-5

    # Ragged size: exercises the zero-pad branch + input/output aliasing.
    x_odd = jax.random.normal(k2, (3, 5, 7), dtype=jnp.float32)
    y_odd = centered_layer(x_odd, force_tiled=True)
    jax.block_until_ready(y_odd)
    assert jnp.allclose(y_odd, x_odd - jnp.mean(x_odd), atol=1e-6)

    # Mid-size input: multi-tile streamed path with a ragged last tile and the
    # two-way (megacore) pass-1 split + clamp/mask logic.
    x_big = jax.random.normal(key, (4100, 512), dtype=jnp.float32)
    y_big = centered_layer(x_big, force_tiled=True)
    jax.block_until_ready(y_big)
    assert jnp.allclose(y_big, x_big - jnp.mean(x_big), atol=1e-5)

    print("KERNEL_OK")
</pallas_src>

<mosaic_0001>
module attributes {stable_mosaic.version = 11 : i64} {
  func.func @_whole_array_kernel(%arg0: memref<4x512xf32, #tpu.memory_space<vmem>>, %arg1: memref<4x512xf32, #tpu.memory_space<vmem>>) attributes {dimension_semantics = [], scalar_prefetch = 0 : i64, scratch_operands = 0 : i64, tpu.core_type = #tpu.core_type<tc>} {
    %cst = arith.constant 0.000000e+00 : f32
    %0 = vector.broadcast %cst : f32 to vector<1x512xf32>
    %c0_i32 = arith.constant 0 : i32
    %c4_i32 = arith.constant 4 : i32
    %1 = arith.muli %c0_i32, %c4_i32 : i32
    %2 = arith.index_cast %1 : i32 to index
    %c0 = arith.constant 0 : index
    %3 = vector.load %arg0[%2, %c0] : memref<4x512xf32, #tpu.memory_space<vmem>>, vector<4x512xf32>
    %cst_0 = arith.constant dense<0.000000e+00> : vector<512xf32>
    %4 = vector.multi_reduction <add>, %3, %cst_0 [0] : vector<4x512xf32> to vector<512xf32>
    %5 = vector.shape_cast %4 : vector<512xf32> to vector<1x512xf32>
    %6 = arith.addf %0, %5 : vector<1x512xf32>
    %c1_i32 = arith.constant 1 : i32
    %7 = vector.shape_cast %6 : vector<1x512xf32> to vector<1x1x512xf32>
    %cst_1 = arith.constant dense<0.000000e+00> : vector<1xf32>
    %8 = vector.multi_reduction <add>, %7, %cst_1 [1, 2] : vector<1x1x512xf32> to vector<1xf32>
    %9 = vector.shape_cast %8 : vector<1xf32> to vector<1x1x1xf32>
    %10 = vector.extract %9[0, 0, 0] : f32 from vector<1x1x1xf32>
    %cst_2 = arith.constant 4.8828125E-4 : f32
    %11 = arith.mulf %10, %cst_2 : f32
    %c0_3 = arith.constant 0 : index
    %c0_4 = arith.constant 0 : index
    %12 = vector.load %arg0[%c0_3, %c0_4] : memref<4x512xf32, #tpu.memory_space<vmem>>, vector<4x512xf32>
    %13 = vector.broadcast %11 : f32 to vector<4x512xf32>
    %14 = arith.subf %12, %13 : vector<4x512xf32>
    %c0_5 = arith.constant 0 : index
    %c0_6 = arith.constant 0 : index
    %15 = vector.load %arg1[%c0_5, %c0_6] : memref<4x512xf32, #tpu.memory_space<vmem>>, vector<4x512xf32>
    tpu.vector_store %arg1[%c0_5, %c0_6], %14 {strides = array<i32>} : memref<4x512xf32, #tpu.memory_space<vmem>>, vector<4x512xf32>,
    return
  }
}

</mosaic_0001>

<llo_original>
// kernel: tpu_custom_call.1
$region0: #{tpu_custom_call.1}
  #allocation0 [shape = 'u32[]', space=smem, size = 0x4, offset = 0x4, fixed_abs, tag = 'smem constant byte address 0x4 - core index']
  #allocation1 [shape = 'u32[72,128]{1,0:T(1,128)}', space=vmem, size = 0x9000, scoped, tag = 'internal scratch']
  %s0 = inlined_call_operand.hbm [shape: f32[4,512], index: 0, kind: input, shape index: {}]
  %s1 = inlined_call_operand.hbm [shape: f32[4,512], index: 1, kind: output, shape index: {}]
  %s2 = sld [smem:[#allocation0]]
  $region18: #{tpu_custom_call.1} parent=0
    _
  %s4 = ssub.s32 1, %s2
  %s5 = scalar_select 0, %s4, %s2
  $region1: #{tpu_custom_call.1} parent=0
    #allocation2 [shape = 'u8[8192]{0}', space=vmem, size = 0x2000, scoped, tag = 'input window, operand 0, single buffered']
    #allocation3 [shape = 's32[1]{0}', space=sflag, size = 0x4, scoped, tag = 'scoped memory for tpu_custom_call.1']
    #allocation4 [shape = 's32[1]{0}', space=sflag, size = 0x4, scoped, tag = 'scoped memory for tpu_custom_call.1']
    #allocation5 [shape = 'u8[8192]{0}', space=vmem, size = 0x2000, scoped, tag = 'output window, operand 0, single buffered']
    %6 = vsyncpa [#allocation3], 0
    %7 = vsyncpa [#allocation4], 0
    // Predicated region
    $region2: #{tpu_custom_call.1} parent=1 // pred_check
      _
    $region3: #{tpu_custom_call.1} parent=1 // pred_check_branch
      %9 = sbr.rel (0) target = $region5
    $region4: #{tpu_custom_call.1} parent=1 // pred_region
      %11 = vsyncadd [#allocation3], 0
      %s13 = sshll.u32 %s0, 4
      %s14 = int_to_ptr.hbm [resolvable:$true] %s13
      %s15 = sshll.u32 [#allocation2], 4
      %s16 = int_to_ptr.vmem [resolvable:$true] %s15
      %18 = dma.hbm_to_vmem [thread:$0]  %s14, 256, %s16, [#allocation3]
    $region5: #{tpu_custom_call.1} parent=1 // pred_fallthru
      _
    // Predicated region
    $region6: #{tpu_custom_call.1} parent=1 // pred_check
      _
    $region7: #{tpu_custom_call.1} parent=1 // pred_check_branch
      %20 = sbr.rel (0) target = $region9
    $region8: #{tpu_custom_call.1} parent=1 // pred_region
      %22 = dma.done [#allocation3], 256
    $region9: #{tpu_custom_call.1} parent=1 // pred_fallthru
      _
    %v23 = vld [vmem:[#allocation2] sm:$0xff]
    %v24 = vld [vmem:[#allocation2 + $0x8] sm:$0xff]
    %27 = vst [vmem:[#allocation1] ss:$2 sm:$0xff] %v23
    %s28 = scalar_lea.vmem [#allocation1], 16
    %29 = vst [vmem:[%s28] ss:$2 sm:$0xff] %v24
    %v30 = vld.sshfl [vmem:[#allocation1] sm:$0xff pattern:$0x75316420]
    %v31 = vld.sshfl [vmem:[#allocation1 + $0x8] sm:$0xff pattern:$0x75316420]
    %v32 = vld.sshfl [vmem:[#allocation1 + $0x10] sm:$0xff pattern:$0x75316420]
    %v33 = vld.sshfl [vmem:[#allocation1 + $0x18] sm:$0xff pattern:$0x75316420]
    %vm38 = vcmask 1043456
    %v39 = vsel %vm38, %v30, 0.0
    %v40 = vrot.slane %v39, 4
    %v41 = vadd.f32 %v39, %v40
    %v42 = vrot.slane %v41, 2
    %v43 = vadd.f32 %v41, %v42
    %v44 = vrot.slane %v43, 1
    %v45 = vadd.f32 %v43, %v44
    %v46 = vsel %vm38, %v31, 0.0
    %v47 = vrot.slane %v46, 4
    %v48 = vadd.f32 %v46, %v47
    %v49 = vrot.slane %v48, 2
    %v50 = vadd.f32 %v48, %v49
    %v51 = vrot.slane %v50, 1
    %v52 = vadd.f32 %v50, %v51
    %v53 = vsel %vm38, %v32, 0.0
    %v54 = vrot.slane %v53, 4
    %v55 = vadd.f32 %v53, %v54
    %v56 = vrot.slane %v55, 2
    %v57 = vadd.f32 %v55, %v56
    %v58 = vrot.slane %v57, 1
    %v59 = vadd.f32 %v57, %v58
    %v60 = vsel %vm38, %v33, 0.0
    %v61 = vrot.slane %v60, 4
    %v62 = vadd.f32 %v60, %v61
    %v63 = vrot.slane %v62, 2
    %v64 = vadd.f32 %v62, %v63
    %v65 = vrot.slane %v64, 1
    %v66 = vadd.f32 %v64, %v65
    %v67 = vadd.f32 %v45, 0.0
    %v68 = vadd.f32 %v52, 0.0
    %v69 = vadd.f32 %v59, 0.0
    %v70 = vadd.f32 %v66, 0.0
    %vm71 = vcmask 1040384
    %v72 = vsel %vm71, %v67, 0.0
    %v73 = vsel %vm71, %v68, 0.0
    %v74 = vadd.f32 %v72, %v73
    %v75 = vsel %vm71, %v69, 0.0
    %v76 = vadd.f32 %v74, %v75
    %v77 = vsel %vm71, %v70, 0.0
    %v78 = vadd.f32 %v76, %v77
    %79 = vadd.xlane.f32.xlu0 %v78
    %v80 = vpop.xlane.xlu0 %79
    %v81 = vrot.slane %v80, 4
    %v82 = vadd.f32 %v80, %v81
    %v83 = vrot.slane %v82, 2
    %v84 = vadd.f32 %v82, %v83
    %v85 = vrot.slane %v84, 1
    %v86 = vadd.f32 %v84, %v85
    %s87 = vtos %v86
    %s88 = smul.f32 %s87, 0.00048828125
    %v89 = vstv %s88
    %v90 = vsub.f32 %v23, %v89
    %v91 = vsub.f32 %v24, %v89
    %92 = vst [vmem:[#allocation5] sm:$0xff] %v90
    %93 = vst [vmem:[#allocation5 + $0x8] sm:$0xff] %v91
    // Predicated region
    $region10: #{tpu_custom_call.1} parent=1 // pred_check
      _
    $region11: #{tpu_custom_call.1} parent=1 // pred_check_branch
      %95 = sbr.rel (0) target = $region13
    $region12: #{tpu_custom_call.1} parent=1 // pred_region
      %97 = vsyncadd [#allocation4], 0
      %s99 = sshll.u32 [#allocation5], 4
      %s100 = int_to_ptr.vmem [resolvable:$true] %s99
      %s101 = sshll.u32 %s1, 4
      %s102 = int_to_ptr.hbm [resolvable:$true] %s101
      %104 = dma.vmem_to_hbm [thread:$0]  %s100, 256, %s102, [#allocation4]
    $region13: #{tpu_custom_call.1} parent=1 // pred_fallthru
      _
    // Predicated region
    $region14: #{tpu_custom_call.1} parent=1 // pred_check
      _
    $region15: #{tpu_custom_call.1} parent=1 // pred_check_branch
      %106 = sbr.rel (0) target = $region17
    $region16: #{tpu_custom_call.1} parent=1 // pred_region
      %108 = dma.done [#allocation4], 256
    $region17: #{tpu_custom_call.1} parent=1 // pred_fallthru
      _
    %109 = vsyncpa [#allocation3], 1
    %110 = vsyncpa [#allocation4], 1

</llo_original>
